<compile_context>
chip_gen: v7x
topology: tpu7x:2x2x1
jax: 0.10.0
libtpu: 0.0.40
codegen_flags: <defaults>
</compile_context>

<pallas_src>
import jax
import jax.numpy as jnp
from jax.experimental import pallas as pl
from jax.experimental.pallas import tpu as pltpu


def _round_up(x, m):
    return (x + m - 1) // m * m


def _vmem_limit_bytes():
    """Scoped-VMEM limit sized to the actual chip generation."""
    cap = 64 * 1024 * 1024  # conservative default (v7x physical VMEM per TC)
    try:
        info = pltpu.get_tpu_info()
        cap = int(getattr(info, "vmem_capacity_bytes", cap))
    except Exception:
        pass
    # Leave headroom for Mosaic internals; ~100 MiB cap on 128 MiB parts.
    return min(cap * 3 // 4, 100 * 1024 * 1024)


# --------------------------------------------------------------------------- #
# Kernels
# --------------------------------------------------------------------------- #
def _fused_kernel(x_ref, wt_ref, b_ref, o_ref):
    # x_ref : (N, in_dim)       full set of one batch element (single HBM read)
    # wt_ref: (in_dim, out_dim) pre-transposed weight (resident, constant map)
    # b_ref : (1, out_dim)      bias (resident)
    # o_ref : (N, out_dim)
    x = x_ref[...]
    xm = jnp.max(x, axis=0, keepdims=True)                       # XLU reduce
    y = jnp.dot(x - xm, wt_ref[...],                             # VPU + MXU
                preferred_element_type=jnp.float32)
    o_ref[...] = (y + b_ref[...]).astype(o_ref.dtype)


def _tiled_kernel(x_ref, xm_ref, wt_ref, b_ref, o_ref):
    # x_ref : (tm, in_dim)  row tile of one batch element
    # xm_ref: (1, in_dim)   per-batch set-max (hoisted XLA reduce)
    # wt_ref: (in_dim, out_dim)
    # b_ref : (1, out_dim)
    # o_ref : (tm, out_dim)
    xc = x_ref[...] - xm_ref[...]                                # VPU broadcast sub
    y = jnp.dot(xc, wt_ref[...], preferred_element_type=jnp.float32)
    o_ref[...] = (y + b_ref[...]).astype(o_ref.dtype)


# --------------------------------------------------------------------------- #
# Wrapper
# --------------------------------------------------------------------------- #
def perm_equi1_max(x, W, b, *, max_rows_per_tile=1024, fuse_max=None):
    """x: (B, N, in_dim), W: (out_dim, in_dim), b: (out_dim,) -> (B, N, out_dim)."""
    B, N, in_dim = x.shape
    out_dim = W.shape[0]
    dtype = x.dtype
    itemsize = jnp.dtype(dtype).itemsize
    sublane = max(8, 32 // itemsize)          # 8 for f32, 16 for bf16

    vmem_limit = _vmem_limit_bytes()

    # Pre-transpose the (tiny) weight once -> natural (M,K)@(K,O) MXU feed.
    Wt = W.T                                  # (in_dim, out_dim)
    b2 = b.reshape(1, out_dim)

    # --- VMEM accounting (includes the resident weight, not just row tiles) --
    w_itemsize = jnp.dtype(W.dtype).itemsize
    resident = 2 * (in_dim * out_dim + out_dim) * w_itemsize     # W_t + b buffers
    # Per x-row cost: double-buffered x & out tiles + f32 intermediates.
    per_row = 2 * (in_dim + out_dim) * itemsize + (in_dim + out_dim) * 4
    tile_budget = max(vmem_limit - resident - (4 << 20), 1 << 20)

    use_fused = fuse_max if fuse_max is not None else (per_row * N <= tile_budget)

    if use_fused:
        # One grid step per batch element; set-max fused in-kernel.
        return pl.pallas_call(
            _fused_kernel,
            out_shape=jax.ShapeDtypeStruct((B, N, out_dim), dtype),
            grid_spec=pltpu.PrefetchScalarGridSpec(
                num_scalar_prefetch=0,
                grid=(B,),
                in_specs=[
                    # Full (N, in_dim) slab: full-extent last two dims are legal
                    # without 8/128 alignment -> zero padding, zero copies.
                    pl.BlockSpec((pl.Squeezed(), N, in_dim), lambda bi: (bi, 0, 0)),
                    pl.BlockSpec((in_dim, out_dim), lambda bi: (0, 0)),
                    pl.BlockSpec((1, out_dim), lambda bi: (0, 0)),
                ],
                out_specs=pl.BlockSpec((pl.Squeezed(), N, out_dim),
                                       lambda bi: (bi, 0, 0)),
            ),
            compiler_params=pltpu.CompilerParams(
                dimension_semantics=("parallel",),
                vmem_limit_bytes=vmem_limit,
            ),
        )(x, Wt, b2)

    # --- fallback for huge N: hoisted XLA max + N-tiled kernel --------------
    xm = jnp.max(x, axis=1, keepdims=True)    # (B, 1, in_dim), cheap mem-bound reduce

    tm = min(_round_up(N, sublane), _round_up(max_rows_per_tile, sublane))
    while tm > sublane and per_row * tm > tile_budget:
        tm = _round_up(tm // 2, sublane)
    tm = max(tm, sublane)

    # Ragged last N tile is handled by Pallas: garbage rows of the edge block
    # only feed garbage output rows whose writeback is discarded.  The feature
    # (K) dim is always full-width, so no garbage ever enters the matmul's K.
    grid = (B, pl.cdiv(N, tm))

    return pl.pallas_call(
        _tiled_kernel,
        out_shape=jax.ShapeDtypeStruct((B, N, out_dim), dtype),
        grid_spec=pltpu.PrefetchScalarGridSpec(
            num_scalar_prefetch=0,
            grid=grid,
            in_specs=[
                pl.BlockSpec((pl.Squeezed(), tm, in_dim), lambda bi, ni: (bi, ni, 0)),
                pl.BlockSpec((pl.Squeezed(), 1, in_dim), lambda bi, ni: (bi, 0, 0)),
                pl.BlockSpec((in_dim, out_dim), lambda bi, ni: (0, 0)),
                pl.BlockSpec((1, out_dim), lambda bi, ni: (0, 0)),
            ],
            out_specs=pl.BlockSpec((pl.Squeezed(), tm, out_dim),
                                   lambda bi, ni: (bi, ni, 0)),
        ),
        compiler_params=pltpu.CompilerParams(
            dimension_semantics=("parallel", "parallel"),
            vmem_limit_bytes=vmem_limit,
        ),
    )(x, xm, Wt, b2)


def perm_equi1_max_ref(x, W, b):
    """Pure-JAX reference matching the PyTorch forward exactly."""
    xm = jnp.max(x, axis=1, keepdims=True)
    return jnp.einsum("bnd,od->bno", x - xm, W) + b


if __name__ == "__main__":
    # Small shapes consistent with the module: batch=2, set size N=8,
    # in_dim=16, out_dim=32.
    B, N, in_dim, out_dim = 2, 8, 16, 32

    key = jax.random.PRNGKey(0)
    kx, kw, kb = jax.random.split(key, 3)

    x = jax.random.normal(kx, (B, N, in_dim), dtype=jnp.float32)

    # Deterministic nn.Linear-style init: U(-1/sqrt(in_dim), 1/sqrt(in_dim))
    bound = 1.0 / jnp.sqrt(jnp.float32(in_dim))
    W = jax.random.uniform(kw, (out_dim, in_dim), jnp.float32, -bound, bound)
    b = jax.random.uniform(kb, (out_dim,), jnp.float32, -bound, bound)

    # Default path: fused in-kernel set-max, grid=(B,).
    out = jax.block_until_ready(perm_equi1_max(x, W, b))
    ref = perm_equi1_max_ref(x, W, b)
    assert out.shape == (B, N, out_dim)
    assert jnp.allclose(out, ref, atol=1e-5, rtol=1e-5), "mismatch vs reference (fused)"

    # Exercise the hoisted-max, N-tiled fallback with a ragged last tile
    # (N=200, tm=64 -> 4 tiles, no padding copies anywhere).
    x2 = jax.random.normal(jax.random.PRNGKey(1), (2, 200, in_dim), jnp.float32)
    out2 = jax.block_until_ready(
        perm_equi1_max(x2, W, b, fuse_max=False, max_rows_per_tile=64))
    ref2 = perm_equi1_max_ref(x2, W, b)
    assert out2.shape == (2, 200, out_dim)
    assert jnp.allclose(out2, ref2, atol=1e-5, rtol=1e-5), "mismatch vs reference (tiled)"

    print("KERNEL_OK")
</pallas_src>

<mosaic_0001>
module attributes {stable_mosaic.version = 11 : i64} {
  func.func @_fused_kernel(%arg0: i32, %arg1: memref<1x8x16xf32, #tpu.memory_space<vmem>>, %arg2: memref<16x32xf32, #tpu.memory_space<vmem>>, %arg3: memref<1x32xf32, #tpu.memory_space<vmem>>, %arg4: memref<1x8x32xf32, #tpu.memory_space<vmem>>) attributes {dimension_semantics = [#tpu.dimension_semantics<parallel>], iteration_bounds = array<i64: 2>, scalar_prefetch = 0 : i64, scratch_operands = 0 : i64, tpu.core_type = #tpu.core_type<tc>, window_params = [{transform_indices = @transform_0, window_bounds = array<i64: 1, 8, 16>}, {pipeline_mode = #tpu.pipeline_mode<synchronous>, transform_indices = @transform_1, window_bounds = array<i64: 16, 32>}, {pipeline_mode = #tpu.pipeline_mode<synchronous>, transform_indices = @transform_2, window_bounds = array<i64: 1, 32>}, {transform_indices = @transform_3, window_bounds = array<i64: 1, 8, 32>}]} {
    %c0 = arith.constant 0 : index
    %c0_0 = arith.constant 0 : index
    %c0_1 = arith.constant 0 : index
    %0 = vector.load %arg1[%c0, %c0_0, %c0_1] : memref<1x8x16xf32, #tpu.memory_space<vmem>>, vector<1x8x16xf32>
    %1 = vector.shape_cast %0 : vector<1x8x16xf32> to vector<8x16xf32>
    %cst = arith.constant dense<0xFF800000> : vector<16xf32>
    %2 = vector.multi_reduction <maximumf>, %1, %cst [0] : vector<8x16xf32> to vector<16xf32>
    %3 = vector.shape_cast %2 : vector<16xf32> to vector<1x16xf32>
    %4 = vector.broadcast %3 : vector<1x16xf32> to vector<8x16xf32>
    %5 = arith.subf %1, %4 : vector<8x16xf32>
    %c0_2 = arith.constant 0 : index
    %c0_3 = arith.constant 0 : index
    %6 = vector.load %arg2[%c0_2, %c0_3] : memref<16x32xf32, #tpu.memory_space<vmem>>, vector<16x32xf32>
    %cst_4 = arith.constant dense<0.000000e+00> : vector<8x32xf32>
    %7 = tpu.matmul %5, %6, %cst_4 {dimension_numbers = #tpu.dot_dimension_numbers<[1], [0], [0], [1], [0, 0, 1, 1], [], []>} : vector<8x16xf32>, vector<16x32xf32>, vector<8x32xf32> -> vector<8x32xf32>
    %c0_5 = arith.constant 0 : index
    %c0_6 = arith.constant 0 : index
    %8 = vector.load %arg3[%c0_5, %c0_6] : memref<1x32xf32, #tpu.memory_space<vmem>>, vector<1x32xf32>
    %9 = vector.broadcast %8 : vector<1x32xf32> to vector<8x32xf32>
    %10 = arith.addf %7, %9 : vector<8x32xf32>
    %c0_7 = arith.constant 0 : index
    %c0_8 = arith.constant 0 : index
    %c0_9 = arith.constant 0 : index
    %11 = vector.load %arg4[%c0_7, %c0_8, %c0_9] : memref<1x8x32xf32, #tpu.memory_space<vmem>>, vector<1x8x32xf32>
    %12 = vector.shape_cast %11 : vector<1x8x32xf32> to vector<8x32xf32>
    %13 = vector.shape_cast %10 : vector<8x32xf32> to vector<1x8x32xf32>
    tpu.vector_store %arg4[%c0_7, %c0_8, %c0_9], %13 {strides = array<i32>} : memref<1x8x32xf32, #tpu.memory_space<vmem>>, vector<1x8x32xf32>,
    return
  }
  func.func @transform_0(%arg0: i32) -> (i32, i32, i32) {
    %c0_i32 = arith.constant 0 : i32
    %c0_i32_0 = arith.constant 0 : i32
    %c0_i32_1 = arith.constant 0 : i32
    return %arg0, %c0_i32, %c0_i32_0 : i32, i32, i32
  }
  func.func @transform_1(%arg0: i32) -> (i32, i32) {
    %c0_i32 = arith.constant 0 : i32
    %c0_i32_0 = arith.constant 0 : i32
    %c0_i32_1 = arith.constant 0 : i32
    return %c0_i32, %c0_i32_0 : i32, i32
  }
  func.func @transform_2(%arg0: i32) -> (i32, i32) {
    %c0_i32 = arith.constant 0 : i32
    %c0_i32_0 = arith.constant 0 : i32
    %c0_i32_1 = arith.constant 0 : i32
    return %c0_i32, %c0_i32_0 : i32, i32
  }
  func.func @transform_3(%arg0: i32) -> (i32, i32, i32) {
    %c0_i32 = arith.constant 0 : i32
    %c0_i32_0 = arith.constant 0 : i32
    %c0_i32_1 = arith.constant 0 : i32
    return %arg0, %c0_i32, %c0_i32_0 : i32, i32, i32
  }
}

</mosaic_0001>

<llo_original>
// kernel: tpu_custom_call.1
$region0: #{tpu_custom_call.1}
  #allocation0 [shape = 'u32[]', space=smem, size = 0x4, offset = 0x4, fixed_abs, tag = 'smem constant byte address 0x4 - core index']
  #allocation1 [shape = 'u32[144,128]{1,0:T(1,128)}', space=vmem, size = 0x12000, scoped, tag = 'internal scratch']
  %s0 = inlined_call_operand.hbm [shape: f32[2,8,16], index: 0, kind: input, shape index: {}]
  %s1 = inlined_call_operand.hbm [shape: f32[16,32], index: 1, kind: input, shape index: {}]
  %s2 = inlined_call_operand.vmem [shape: f32[1,32], index: 2, kind: input, shape index: {}]
  %s3 = inlined_call_operand.hbm [shape: f32[2,8,32], index: 3, kind: output, shape index: {}]
  %s4 = sld [smem:[#allocation0]]
  $region53: #{tpu_custom_call.1} parent=0
    _
  %s6 = ssub.s32 1, %s4
  %s7 = scalar_select 0, %s6, %s4
  $region1: #{tpu_custom_call.1} parent=0
    #allocation2 [shape = 'u8[8192]{0}', space=vmem, size = 0x2000, scoped, tag = 'input window, operand 0']
    #allocation3 [shape = 's32[2]{0}', space=sflag, size = 0x8, scoped, tag = 'scoped memory for tpu_custom_call.1']
    #allocation4 [shape = 's32[2]{0}', space=sflag, size = 0x8, scoped, tag = 'scoped memory for tpu_custom_call.1']
    #allocation5 [shape = 'u8[8192]{0}', space=vmem, size = 0x2000, scoped, tag = 'input window, operand 1, single buffered']
    #allocation6 [shape = 's32[1]{0}', space=sflag, size = 0x4, scoped, tag = 'scoped memory for tpu_custom_call.1']
    #allocation7 [shape = 'u8[8192]{0}', space=vmem, size = 0x2000, scoped, tag = 'output window, operand 0']
    %8 = vsyncpa [#allocation3], 0
    %s9 = scalar_lea.sflag [#allocation3], 1
    %10 = vsyncpa %s9, 0
    %11 = vsyncpa [#allocation6], 0
    %12 = vsyncpa [#allocation4], 0
    %s13 = scalar_lea.sflag [#allocation4], 1
    %14 = vsyncpa %s13, 0
    loop: start=0, step=1, limit=4
    $region2: #{tpu_custom_call.1} parent=1 // loop_pre_header
      _
    $region3: #{tpu_custom_call.1} parent=1 // loop_header
      %s16 = sphi 0, %s20
      %p17 = scmp.ge.s32.totalorder %s16, 4
      %s26 = sphi 0, %s28
      %s29 = sphi 0, %s26
      %s30 = sphi 0, %s29
      %s46 = sphi 0, %s30
      %s50 = sphi 0, %s50
      %s52 = sphi 0, %s50
      %s53 = sphi 0, %s52
      %s67 = sphi 0, %s53
      %s71 = sphi 0, %s71
      %s73 = sphi 0, %s71
      %s74 = sphi 0, %s73
      %s88 = sphi 0, %s74
      %s94 = sphi 0, %s96
      %s97 = sphi 0, %s94
      %s98 = sphi 0, %s97
      %s114 = sphi 0, %s98
    $region4: #{tpu_custom_call.1} parent=1 // loop_header_branch
      %19 = sbr.rel (%p17) target = $region8
    $region5: #{tpu_custom_call.1} parent=1 // loop_body
      %s21 = ssub.s32 %s16, 1
      %s22 = ssub.s32 %s16, 2
      %s23 = sadd.s32 %s16, 1
      %s24 = ssub.s32 %s16, %s23
      %p25 = scmp.eq.s32.totalorder %s24, 0
      %s27 = sadd.s32 %s26, 1
      %s28 = scalar_select %p25, %s26, %s27
      %p31 = pneg %p25
      %p32 = scmp.eq.s32.totalorder %s16, 1
      %p33 = por %p31, %p32
      %p34 = scmp.ne.s32.totalorder %s26, %s29
      %p35 = scmp.eq.s32.totalorder %s16, 0
      %p36 = por %p34, %p35
      %p37 = scmp.ne.s32.totalorder %s26, %s29
      %p38 = scmp.eq.s32.totalorder %s21, 1
      %p39 = por %p37, %p38
      %p40 = scmp.ne.s32.totalorder %s29, %s30
      %p41 = scmp.eq.s32.totalorder %s21, 0
      %p42 = por %p40, %p41
      %p43 = scmp.ne.s32.totalorder %s29, %s30
      %p44 = scmp.eq.s32.totalorder %s22, 1
      %p45 = por %p43, %p44
      %p47 = scmp.ne.s32.totalorder %s30, %s46
      %p48 = scmp.eq.s32.totalorder %s22, 0
      %p49 = por %p47, %p48
      %s51 = sadd.s32 %s50, 1
      %p54 = scmp.eq.s32.totalorder %s16, 1
      %p55 = scmp.ne.s32.totalorder %s50, %s52
      %p56 = scmp.eq.s32.totalorder %s16, 0
      %p57 = por %p55, %p56
      %p58 = scmp.ne.s32.totalorder %s50, %s52
      %p59 = scmp.eq.s32.totalorder %s21, 1
      %p60 = por %p58, %p59
      %p61 = scmp.ne.s32.totalorder %s52, %s53
      %p62 = scmp.eq.s32.totalorder %s21, 0
      %p63 = por %p61, %p62
      %p64 = scmp.ne.s32.totalorder %s52, %s53
      %p65 = scmp.eq.s32.totalorder %s22, 1
      %p66 = por %p64, %p65
      %p68 = scmp.ne.s32.totalorder %s53, %s67
      %p69 = scmp.eq.s32.totalorder %s22, 0
      %p70 = por %p68, %p69
      %s72 = sadd.s32 %s71, 1
      %p75 = scmp.eq.s32.totalorder %s16, 1
      %p76 = scmp.ne.s32.totalorder %s71, %s73
      %p77 = scmp.eq.s32.totalorder %s16, 0
      %p78 = por %p76, %p77
      %p79 = scmp.ne.s32.totalorder %s71, %s73
      %p80 = scmp.eq.s32.totalorder %s21, 1
      %p81 = por %p79, %p80
      %p82 = scmp.ne.s32.totalorder %s73, %s74
      %p83 = scmp.eq.s32.totalorder %s21, 0
      %p84 = por %p82, %p83
      %p85 = scmp.ne.s32.totalorder %s73, %s74
      %p86 = scmp.eq.s32.totalorder %s22, 1
      %p87 = por %p85, %p86
      %p89 = scmp.ne.s32.totalorder %s74, %s88
      %p90 = scmp.eq.s32.totalorder %s22, 0
      %p91 = por %p89, %p90
      %s92 = ssub.s32 %s16, %s23
      %p93 = scmp.eq.s32.totalorder %s92, 0
      %s95 = sadd.s32 %s94, 1
      %s96 = scalar_select %p93, %s94, %s95
      %p99 = pneg %p93
      %p100 = scmp.eq.s32.totalorder %s16, 1
      %p101 = por %p99, %p100
      %p102 = scmp.ne.s32.totalorder %s94, %s97
      %p103 = scmp.eq.s32.totalorder %s16, 0
      %p104 = por %p102, %p103
      %p105 = scmp.ne.s32.totalorder %s94, %s97
      %p106 = scmp.eq.s32.totalorder %s21, 1
      %p107 = por %p105, %p106
      %p108 = scmp.ne.s32.totalorder %s97, %s98
      %p109 = scmp.eq.s32.totalorder %s21, 0
      %p110 = por %p108, %p109
      %p111 = scmp.ne.s32.totalorder %s97, %s98
      %p112 = scmp.eq.s32.totalorder %s22, 1
      %p113 = por %p111, %p112
      %p115 = scmp.ne.s32.totalorder %s98, %s114
      %p116 = scmp.eq.s32.totalorder %s22, 0
      %p117 = por %p115, %p116
      %p118 = scmp.le.s32.totalorder 1, %s16
      %p119 = scmp.lt.s32.totalorder %s16, 3
      %p120 = pnand %p118, %p119
      %p121 = pneg %p120
      // Predicated region
      $region9: #{tpu_custom_call.1} parent=5 // pred_check
        _
      $region10: #{tpu_custom_call.1} parent=5 // pred_check_branch
        %123 = sbr.rel (%p120) target = $region12
      $region11: #{tpu_custom_call.1} parent=5 // pred_region
        %s124 = ssub.s32 %s16, 1
        // Predicated region
        $region13: #{tpu_custom_call.1} parent=11 // pred_check
          %p125 = pneg %p63
        $region14: #{tpu_custom_call.1} parent=11 // pred_check_branch
          %127 = sbr.rel (%p125) target = $region16
        $region15: #{tpu_custom_call.1} parent=11 // pred_region
          %s129 = ssub.s32 256, 256
          %130 = vsyncadd [#allocation6], %s129
          %s131 = sshll.u32 [#allocation5], 4
          %s132 = int_to_ptr.vmem [resolvable:$true] %s131
          %137 = dma.hbm_to_vmem [thread:$0]  %s1, 256, %s132, [#allocation6], 128, 128, 8
        $region16: #{tpu_custom_call.1} parent=11 // pred_fallthru
          _
        // Predicated region
        $region17: #{tpu_custom_call.1} parent=11 // pred_check
          %p138 = pneg %p84
        $region18: #{tpu_custom_call.1} parent=11 // pred_check_branch
          %140 = sbr.rel (%p138) target = $region20
        $region19: #{tpu_custom_call.1} parent=11 // pred_region
          _
        $region20: #{tpu_custom_call.1} parent=11 // pred_fallthru
          _
      $region12: #{tpu_custom_call.1} parent=5 // pred_fallthru
        _
      %p141 = scmp.lt.s32.totalorder %s16, 2
      // Predicated region
      $region21: #{tpu_custom_call.1} parent=5 // pred_check
        %p142 = pneg %p141
      $region22: #{tpu_custom_call.1} parent=5 // pred_check_branch
        %144 = sbr.rel (%p142) target = $region24
      $region23: #{tpu_custom_call.1} parent=5 // pred_region
        // Predicated region
        $region25: #{tpu_custom_call.1} parent=23 // pred_check
          %p145 = pneg %p36
        $region26: #{tpu_custom_call.1} parent=23 // pred_check_branch
          %147 = sbr.rel (%p145) target = $region28
        $region27: #{tpu_custom_call.1} parent=23 // pred_region
          %s148 = sand.u32 %s26, 1
          %s149 = scalar_lea.sflag [#allocation3], %s148
          %s150 = sand.u32 %s26, 1
          %s151 = smul.addr %s150, 8
          %s152 = scalar_lea.vmem [#allocation2], %s151
          %s154 = ssub.s32 128, 128
          %155 = vsyncadd %s149, %s154
          %s156 = smul.addr %s16, 128
          %s157 = scalar_lea.hbm %s0, %s156
          %s159 = sshll.u32 %s152, 4
          %s160 = int_to_ptr.vmem [resolvable:$true] %s159
          %162 = dma.hbm_to_vmem [thread:$0]  %s157, 128, %s160, %s149
        $region28: #{tpu_custom_call.1} parent=23 // pred_fallthru
          _
      $region24: #{tpu_custom_call.1} parent=5 // pred_fallthru
        _
      %p163 = scmp.le.s32.totalorder 1, %s16
      %p164 = scmp.lt.s32.totalorder %s16, 3
      %p165 = pnand %p163, %p164
      %p166 = pneg %p165
      // Predicated region
      $region29: #{tpu_custom_call.1} parent=5 // pred_check
        _
      $region30: #{tpu_custom_call.1} parent=5 // pred_check_branch
        %168 = sbr.rel (%p165) target = $region32
      $region31: #{tpu_custom_call.1} parent=5 // pred_region
        %s169 = ssub.s32 %s16, 1
        %s170 = sand.u32 %s29, 1
        %s171 = scalar_lea.sflag [#allocation3], %s170
        %s172 = sand.u32 %s29, 1
        %s173 = smul.addr %s172, 8
        %s174 = scalar_lea.vmem [#allocation2], %s173
        // Predicated region
        $region33: #{tpu_custom_call.1} parent=31 // pred_check
          %p175 = pneg %p42
        $region34: #{tpu_custom_call.1} parent=31 // pred_check_branch
          %177 = sbr.rel (%p175) target = $region36
        $region35: #{tpu_custom_call.1} parent=31 // pred_region
          %178 = dma.done %s171, 128
        $region36: #{tpu_custom_call.1} parent=31 // pred_fallthru
          _
        // Predicated region
        $region37: #{tpu_custom_call.1} parent=31 // pred_check
          %p179 = pneg %p63
        $region38: #{tpu_custom_call.1} parent=31 // pred_check_branch
          %181 = sbr.rel (%p179) target = $region40
        $region39: #{tpu_custom_call.1} parent=31 // pred_region
          %182 = dma.done [#allocation6], 256
        $region40: #{tpu_custom_call.1} parent=31 // pred_fallthru
          _
        %s183 = sand.u32 %s29, 1
        %s184 = scalar_lea.sflag [#allocation3], %s183
        %s185 = sand.u32 %s29, 1
        %s186 = smul.addr %s185, 8
        %s187 = scalar_lea.vmem [#allocation2], %s186
        %p188 = pneg %p42
        %p189 = pneg %p39
        %p190 = pneg %p63
        %p191 = pneg %p60
        %p192 = pneg %p84
        %p193 = pneg %p81
        %p194 = pneg %p110
        %p195 = pneg %p107
        %s196 = sand.u32 %s97, 1
        %s197 = scalar_lea.sflag [#allocation4], %s196
        %s198 = sand.u32 %s97, 1
        %s199 = smul.addr %s198, 8
        %s200 = scalar_lea.vmem [#allocation7], %s199
        %v201 = vld [vmem:[%s174] sm:$0xff]
        %vm202 = vcmask 130048
        %v203 = vsel %vm202, %v201, -inf
        %v204 = vrot.slane %v203, 4
        %v205 = vmax.f32 %v203, %v204
        %v206 = vrot.slane %v205, 2
        %v207 = vmax.f32 %v205, %v206
        %v208 = vrot.slane %v207, 1
        %v209 = vmax.f32 %v207, %v208
        %v210 = vsub.f32 %v201, %v209
        %v211 = vld [vmem:[#allocation5] sm:$0xff]
        %v212 = vld [vmem:[#allocation5 + $0x8] sm:$0xff]
        %v213 = vld [vmem:[%s2] sm:$0x1]
        %v215 = vlaneseq
        %v216 = vshrl.u32 %v215, 7
        %v217 = vsub.s32 0, %v216
        %v218 = vrot.slane %v213, %v217
        %v221 = vsel %vm202, %v210, 0
        %223 = vmatprep.subr.mxu0 0.0
        %224 = vmatpush1.msra.mxu0 %v211
        %225 = vmatprep.subr.mxu0 0.0
        %226 = vmatpush1.msra.mxu0 %v212
        %227 = vmatprep.subr.mxu0 0.0
        %228 = vmatpush1.msra.mxu0 0.0
        %229 = vmatprep.subr.mxu0 0.0
        %230 = vmatpush1.msra.mxu0 0.0
        %231 = vmatprep.subr.mxu0 0.0
        %232 = vmatpush1.msra.mxu0 0.0
        %233 = vmatprep.subr.mxu0 0.0
        %234 = vmatpush1.msra.mxu0 0.0
        %235 = vmatprep.subr.mxu0 0.0
        %236 = vmatpush1.msra.mxu0 0.0
        %237 = vmatprep.subr.mxu0 0.0
        %238 = vmatpush1.msra.mxu0 0.0
        %239 = vmatprep.subr.mxu0 0.0
        %240 = vmatpush1.msra.mxu0 0.0
        %241 = vmatprep.subr.mxu0 0.0
        %242 = vmatpush1.msra.mxu0 0.0
        %243 = vmatprep.subr.mxu0 0.0
        %244 = vmatpush1.msra.mxu0 0.0
        %245 = vmatprep.subr.mxu0 0.0
        %246 = vmatpush1.msra.mxu0 0.0
        %247 = vmatprep.subr.mxu0 0.0
        %248 = vmatpush1.msra.mxu0 0.0
        %249 = vmatprep.subr.mxu0 0.0
        %250 = vmatpush1.msra.mxu0 0.0
        %251 = vmatprep.subr.mxu0 0.0
        %252 = vmatpush1.msra.mxu0 0.0
        %253 = vmatprep.subr.mxu0 0.0
        %254 = vmatpush1.msra.mxu0 0.0
        %255 = vmatprep.subr.mxu0 0.0
        %256 = vmatpush1.msra.mxu0 0.0
        %257 = vmatprep.subr.mxu0 0.0
        %258 = vmatpush1.msra.mxu0 0.0
        %259 = vmatprep.subr.mxu0 0.0
        %260 = vmatpush1.msra.mxu0 0.0
        %261 = vmatprep.subr.mxu0 0.0
        %262 = vmatpush1.msra.mxu0 0.0
        %263 = vmatprep.subr.mxu0 0.0
        %264 = vmatpush1.msra.mxu0 0.0
        %265 = vmatprep.subr.mxu0 0.0
        %266 = vmatpush1.msra.mxu0 0.0
        %267 = vmatprep.subr.mxu0 0.0
        %268 = vmatpush1.msra.mxu0 0.0
        %269 = vmatprep.subr.mxu0 0.0
        %270 = vmatpush1.msra.mxu0 0.0
        %271 = vmatprep.subr.mxu0 0.0
        %272 = vmatpush1.msra.mxu0 0.0
        %273 = vmatprep.subr.mxu0 0.0
        %274 = vmatpush1.msra.mxu0 0.0
        %275 = vmatprep.subr.mxu0 0.0
        %276 = vmatpush1.msra.mxu0 0.0
        %277 = vmatprep.subr.mxu0 0.0
        %278 = vmatpush1.msra.mxu0 0.0
        %279 = vmatprep.subr.mxu0 0.0
        %280 = vmatpush1.msra.mxu0 0.0
        %281 = vmatprep.subr.mxu0 0.0
        %282 = vmatpush1.msra.mxu0 0.0
        %283 = vmatprep.subr.mxu0 0.0
        %284 = vmatpush1.msra.mxu0 0.0
        %285 = vmatprep.subr.mxu0 0.0
        %286 = vmatpush1.msra.mxu0 0.0
        %287 = vmatprep.mubr.f32.mxu0 0.0
        %288 = vmatmul.mubr.f32.gmra.mrb[0].mxu0 %v221
        %v289 = vpop.f32.mrb[0].mxu0
        %v290 = vadd.f32 %v218, %v289
        %v291 = vpop.f32.mrb[0].mxu0
        %292 = vdwg.mxu0
        %vm293 = vcmask 261120
        %294 = vst.msk [vmem:[%s200] sm:$0xff] %vm293, %v290
        %s295 = sand.u32 %s97, 1
        %s296 = scalar_lea.sflag [#allocation4], %s295
        %s297 = sand.u32 %s97, 1
        %s298 = smul.addr %s297, 8
        %s299 = scalar_lea.vmem [#allocation7], %s298
        // Predicated region
        $region41: #{tpu_custom_call.1} parent=31 // pred_check
          %p300 = pneg %p107
        $region42: #{tpu_custom_call.1} parent=31 // pred_check_branch
          %302 = sbr.rel (%p300) target = $region44
        $region43: #{tpu_custom_call.1} parent=31 // pred_region
          %s304 = ssub.s32 128, 128
          %305 = vsyncadd %s296, %s304
          %s306 = smul.addr %s21, 128
          %s307 = scalar_lea.hbm %s3, %s306
          %s309 = sshll.u32 %s299, 4
          %s310 = int_to_ptr.vmem [resolvable:$true] %s309
          %312 = dma.vmem_to_hbm [thread:$0]  %s310, 128, %s307, %s296
        $region44: #{tpu_custom_call.1} parent=31 // pred_fallthru
          _
      $region32: #{tpu_custom_call.1} parent=5 // pred_fallthru
        _
      %p313 = scmp.le.s32.totalorder 2, %s16
      // Predicated region
      $region45: #{tpu_custom_call.1} parent=5 // pred_check
        %p314 = pneg %p313
      $region46: #{tpu_custom_call.1} parent=5 // pred_check_branch
        %316 = sbr.rel (%p314) target = $region48
      $region47: #{tpu_custom_call.1} parent=5 // pred_region
        %s317 = ssub.s32 %s16, 2
        // Predicated region
        $region49: #{tpu_custom_call.1} parent=47 // pred_check
          %p318 = pneg %p113
        $region50: #{tpu_custom_call.1} parent=47 // pred_check_branch
          %320 = sbr.rel (%p318) target = $region52
        $region51: #{tpu_custom_call.1} parent=47 // pred_region
          %s321 = sand.u32 %s98, 1
          %s322 = scalar_lea.sflag [#allocation4], %s321
          %s323 = sand.u32 %s98, 1
          %s324 = smul.addr %s323, 8
          %s325 = scalar_lea.vmem [#allocation7], %s324
          %326 = dma.done %s322, 128
        $region52: #{tpu_custom_call.1} parent=47 // pred_fallthru
          _
      $region48: #{tpu_custom_call.1} parent=5 // pred_fallthru
        _
    $region6: #{tpu_custom_call.1} parent=1 // loop_footer
      %s20 = sadd.s32 1, %s16
    $region7: #{tpu_custom_call.1} parent=1 // loop_footer_branch
      %15 = sbr.rel target = $region3
    $region8: #{tpu_custom_call.1} parent=1 // loop_exit
      _
    %327 = vsyncpa [#allocation3], 1
    %s328 = scalar_lea.sflag [#allocation3], 1
    %329 = vsyncpa %s328, 1
    %330 = vsyncpa [#allocation6], 1
    %331 = vsyncpa [#allocation4], 1
    %s332 = scalar_lea.sflag [#allocation4], 1
    %333 = vsyncpa %s332, 1

</llo_original>
